<compile_context>
chip_gen: v6e
topology: v6e:2x2x1
jax: 0.10.0
libtpu: 0.0.40
codegen_flags: <defaults>
</compile_context>

<pallas_src>
import jax
import jax.numpy as jnp
from jax.experimental import pallas as pl
from jax.experimental.pallas import tpu as pltpu


def _round_up(n, m):
    return ((n + m - 1) // m) * m


def _prelu(x, alpha):
    return jnp.maximum(x, 0.0) + alpha * jnp.minimum(x, 0.0)


def classification_kernel(
    x_ref,    # (TB, D)  bf16   batch tile of flattened input
    w1_ref,   # (D, H)   bf16   embedding layer-1 weight   (VMEM resident)
    b1_ref,   # (1, H)   f32                               (VMEM resident)
    a1_ref,   # (1, 1)   f32    embedding PReLU alpha      (SMEM scalar)
    w2_ref,   # (H, 2)   f32                               (VMEM resident)
    b2_ref,   # (1, 2)   f32                               (VMEM resident)
    ah_ref,   # (1, 1)   f32    head PReLU alpha           (SMEM scalar)
    fcw_ref,  # (2, NP)  f32    fc1 weight, lane-padded    (VMEM resident)
    fcb_ref,  # (1, NP)  f32    fc1 bias, padded cols=-1e30
    out_ref,  # (TB, NP) f32    log-softmax scores (lane-dense slab)
):
    # --- embedding_net: Linear(D,H) [bf16 x bf16 -> f32 acc] -> PReLU -> Linear(H,2)
    h = jnp.dot(x_ref[...], w1_ref[...], preferred_element_type=jnp.float32)
    h = h + b1_ref[...]
    h = _prelu(h, a1_ref[0, 0])
    emb = jnp.dot(h, w2_ref[...], preferred_element_type=jnp.float32) + b2_ref[...]

    # --- ClassificationNet head: PReLU -> fc1 -> log_softmax
    emb = _prelu(emb, ah_ref[0, 0])
    # K=2, N=n_classes matmul: two VPU broadcast FMAs, skip the MXU entirely.
    logits = (emb[:, 0:1] * fcw_ref[0:1, :]
              + emb[:, 1:2] * fcw_ref[1:2, :]
              + fcb_ref[...])

    # Numerically stable log_softmax; padded class columns carry bias -1e30 so
    # exp(z) underflows to 0 in the normalizer; the wrapper slices them off.
    m = jnp.max(logits, axis=-1, keepdims=True)
    z = logits - m
    lse = jnp.log(jnp.sum(jnp.exp(z), axis=-1, keepdims=True))
    out_ref[...] = (z - lse).astype(out_ref.dtype)


def classification_net_forward(x_nchw, params, *, batch_tile=256):
    B = x_nchw.shape[0]
    x_flat = x_nchw.reshape(B, -1)                  # torch .view(B, -1), row-major
    D = x_flat.shape[1]
    H = params["w1"].shape[1]
    n_classes = params["fc1_w"].shape[1]

    # bf16 for the dominant operand (x) and w1: halves HBM bytes, bf16 MXU path.
    x_flat = x_flat.astype(jnp.bfloat16)
    w1 = params["w1"].astype(jnp.bfloat16)

    # Batch tiling: TB multiple of 8 sublanes; pad B up to a multiple of TB.
    TB = min(batch_tile, _round_up(B, 8))
    Bp = _round_up(B, TB)
    if Bp != B:
        x_flat = jnp.pad(x_flat, ((0, Bp - B), (0, 0)))

    # Lane-dense output: pad n_classes up to a multiple of 128 (unmasked vst).
    NP = _round_up(n_classes, 128)
    fcw = jnp.pad(params["fc1_w"].astype(jnp.float32),
                  ((0, 0), (0, NP - n_classes)))
    fcb = jnp.pad(params["fc1_b"].astype(jnp.float32),
                  ((0, 0), (0, NP - n_classes)), constant_values=-1e30)

    b1 = params["b1"].astype(jnp.float32)
    w2 = params["w2"].astype(jnp.float32)
    b2 = params["b2"].astype(jnp.float32)
    a1 = params["a1"].astype(jnp.float32).reshape(1, 1)
    ah = params["a_head"].astype(jnp.float32).reshape(1, 1)

    # Whole-(1,1)-array lives in SMEM; cheap scalar read inside the kernel.
    smem_scalar = pl.BlockSpec(memory_space=pltpu.MemorySpace.SMEM)

    out = pl.pallas_call(
        classification_kernel,
        out_shape=jax.ShapeDtypeStruct((Bp, NP), jnp.float32),
        grid_spec=pltpu.PrefetchScalarGridSpec(
            num_scalar_prefetch=0,
            grid=(Bp // TB,),
            in_specs=[
                pl.BlockSpec((TB, D), lambda i: (i, 0)),   # x: tiled over batch
                pl.BlockSpec((D, H), lambda i: (0, 0)),    # w1: resident
                pl.BlockSpec((1, H), lambda i: (0, 0)),    # b1: resident
                smem_scalar,                               # a1: SMEM scalar
                pl.BlockSpec((H, 2), lambda i: (0, 0)),    # w2: resident
                pl.BlockSpec((1, 2), lambda i: (0, 0)),    # b2: resident
                smem_scalar,                               # a_head: SMEM scalar
                pl.BlockSpec((2, NP), lambda i: (0, 0)),   # fc1 weight: resident
                pl.BlockSpec((1, NP), lambda i: (0, 0)),   # fc1 bias: resident
            ],
            out_specs=pl.BlockSpec((TB, NP), lambda i: (i, 0)),
        ),
        compiler_params=pltpu.CompilerParams(
            dimension_semantics=("parallel",),      # megacore split on v7x; no-op elsewhere
            vmem_limit_bytes=32 * 1024 * 1024,      # tiles sized to fit v5e/v6e/v7x
        ),
    )(x_flat, w1, b1, a1, w2, b2, ah, fcw, fcb)

    # Strip batch padding and lane padding.
    return out[:B, :n_classes]


def make_params(key, d_in, hidden, n_classes):
    ks = jax.random.split(key, 6)
    f32 = jnp.float32
    return {
        "w1": jax.random.normal(ks[0], (d_in, hidden), f32) * 0.05,
        "b1": jax.random.normal(ks[1], (1, hidden), f32) * 0.05,
        "a1": jnp.full((1, 1), 0.25, f32),          # nn.PReLU default init
        "w2": jax.random.normal(ks[2], (hidden, 2), f32) * 0.05,
        "b2": jax.random.normal(ks[3], (1, 2), f32) * 0.05,
        "a_head": jnp.full((1, 1), 0.25, f32),      # ClassificationNet.nonlinear
        "fc1_w": jax.random.normal(ks[4], (2, n_classes), f32) * 0.5,
        "fc1_b": jax.random.normal(ks[5], (1, n_classes), f32) * 0.5,
    }


def reference_forward(x_nchw, p):
    # Pure-JAX f32 reference of the same forward pass.
    B = x_nchw.shape[0]
    x = x_nchw.reshape(B, -1).astype(jnp.float32)
    h = x @ p["w1"] + p["b1"]
    h = jnp.maximum(h, 0) + p["a1"][0, 0] * jnp.minimum(h, 0)
    e = h @ p["w2"] + p["b2"]
    e = jnp.maximum(e, 0) + p["a_head"][0, 0] * jnp.minimum(e, 0)
    logits = e @ p["fc1_w"] + p["fc1_b"]
    return jax.nn.log_softmax(logits, axis=-1)


if __name__ == "__main__":
    key = jax.random.PRNGKey(0)
    k_x, k_p = jax.random.split(key)

    B, C, H, W = 2, 4, 16, 16          # NCHW input, like PyTorch
    hidden = 32
    n_classes = 10
    d_in = C * H * W

    x = jax.random.normal(k_x, (B, C, H, W), jnp.float32)
    params = make_params(k_p, d_in, hidden, n_classes)

    scores = classification_net_forward(x, params)
    scores = jax.block_until_ready(scores)

    ref = reference_forward(x, params)
    assert scores.shape == (B, n_classes)
    # Kernel runs the first matmul in bf16 (f32 accumulate) -> loose tolerance vs f32 ref.
    assert jnp.allclose(scores, ref, atol=5e-2, rtol=5e-2), "mismatch vs JAX reference"
    # log-softmax rows should sum (in prob space) to 1
    assert jnp.allclose(jnp.sum(jnp.exp(scores), axis=-1), 1.0, atol=1e-3)

    print("KERNEL_OK")
</pallas_src>

<mosaic_0001>
module attributes {stable_mosaic.version = 11 : i64} {
  func.func @classification_kernel(%arg0: i32, %arg1: memref<8x1024xbf16, #tpu.memory_space<vmem>>, %arg2: memref<1024x32xbf16, #tpu.memory_space<vmem>>, %arg3: memref<1x32xf32, #tpu.memory_space<vmem>>, %arg4: memref<1x1xf32, #tpu.memory_space<smem>>, %arg5: memref<32x2xf32, #tpu.memory_space<vmem>>, %arg6: memref<1x2xf32, #tpu.memory_space<vmem>>, %arg7: memref<1x1xf32, #tpu.memory_space<smem>>, %arg8: memref<2x128xf32, #tpu.memory_space<vmem>>, %arg9: memref<1x128xf32, #tpu.memory_space<vmem>>, %arg10: memref<8x128xf32, #tpu.memory_space<vmem>>) attributes {dimension_semantics = [#tpu.dimension_semantics<parallel>], iteration_bounds = array<i64: 1>, scalar_prefetch = 0 : i64, scratch_operands = 0 : i64, tpu.core_type = #tpu.core_type<tc>, window_params = [{transform_indices = @transform_0, window_bounds = array<i64: 8, 1024>}, {pipeline_mode = #tpu.pipeline_mode<synchronous>, transform_indices = @transform_1, window_bounds = array<i64: 1024, 32>}, {pipeline_mode = #tpu.pipeline_mode<synchronous>, transform_indices = @transform_2, window_bounds = array<i64: 1, 32>}, {transform_indices = @transform_3, window_bounds = array<i64: 1, 1>}, {pipeline_mode = #tpu.pipeline_mode<synchronous>, transform_indices = @transform_4, window_bounds = array<i64: 32, 2>}, {pipeline_mode = #tpu.pipeline_mode<synchronous>, transform_indices = @transform_5, window_bounds = array<i64: 1, 2>}, {transform_indices = @transform_6, window_bounds = array<i64: 1, 1>}, {pipeline_mode = #tpu.pipeline_mode<synchronous>, transform_indices = @transform_7, window_bounds = array<i64: 2, 128>}, {pipeline_mode = #tpu.pipeline_mode<synchronous>, transform_indices = @transform_8, window_bounds = array<i64: 1, 128>}, {transform_indices = @transform_9, window_bounds = array<i64: 8, 128>}]} {
    %c0 = arith.constant 0 : index
    %c0_0 = arith.constant 0 : index
    %0 = vector.load %arg1[%c0, %c0_0] : memref<8x1024xbf16, #tpu.memory_space<vmem>>, vector<8x1024xbf16>
    %c0_1 = arith.constant 0 : index
    %c0_2 = arith.constant 0 : index
    %1 = vector.load %arg2[%c0_1, %c0_2] : memref<1024x32xbf16, #tpu.memory_space<vmem>>, vector<1024x32xbf16>
    %cst = arith.constant dense<0.000000e+00> : vector<8x32xf32>
    %2 = tpu.matmul %0, %1, %cst {dimension_numbers = #tpu.dot_dimension_numbers<[1], [0], [0], [1], [0, 0, 1, 1], [], []>} : vector<8x1024xbf16>, vector<1024x32xbf16>, vector<8x32xf32> -> vector<8x32xf32>
    %c0_3 = arith.constant 0 : index
    %c0_4 = arith.constant 0 : index
    %3 = vector.load %arg3[%c0_3, %c0_4] : memref<1x32xf32, #tpu.memory_space<vmem>>, vector<1x32xf32>
    %4 = vector.broadcast %3 : vector<1x32xf32> to vector<8x32xf32>
    %5 = arith.addf %2, %4 : vector<8x32xf32>
    %c0_5 = arith.constant 0 : index
    %c0_6 = arith.constant 0 : index
    %6 = memref.load %arg4[%c0_5, %c0_6] : memref<1x1xf32, #tpu.memory_space<smem>>
    %cst_7 = arith.constant 0.000000e+00 : f32
    %7 = vector.broadcast %cst_7 : f32 to vector<8x32xf32>
    %8 = arith.maximumf %5, %7 : vector<8x32xf32>
    %cst_8 = arith.constant 0.000000e+00 : f32
    %9 = vector.broadcast %cst_8 : f32 to vector<8x32xf32>
    %10 = arith.minimumf %5, %9 : vector<8x32xf32>
    %11 = vector.broadcast %6 : f32 to vector<8x32xf32>
    %12 = arith.mulf %11, %10 : vector<8x32xf32>
    %13 = arith.addf %8, %12 : vector<8x32xf32>
    %c0_9 = arith.constant 0 : index
    %c0_10 = arith.constant 0 : index
    %14 = vector.load %arg5[%c0_9, %c0_10] : memref<32x2xf32, #tpu.memory_space<vmem>>, vector<32x2xf32>
    %cst_11 = arith.constant dense<0.000000e+00> : vector<8x2xf32>
    %15 = tpu.matmul %13, %14, %cst_11 {dimension_numbers = #tpu.dot_dimension_numbers<[1], [0], [0], [1], [0, 0, 1, 1], [], []>} : vector<8x32xf32>, vector<32x2xf32>, vector<8x2xf32> -> vector<8x2xf32>
    %c0_12 = arith.constant 0 : index
    %c0_13 = arith.constant 0 : index
    %16 = vector.load %arg6[%c0_12, %c0_13] : memref<1x2xf32, #tpu.memory_space<vmem>>, vector<1x2xf32>
    %17 = vector.broadcast %16 : vector<1x2xf32> to vector<8x2xf32>
    %18 = arith.addf %15, %17 : vector<8x2xf32>
    %c0_14 = arith.constant 0 : index
    %c0_15 = arith.constant 0 : index
    %19 = memref.load %arg7[%c0_14, %c0_15] : memref<1x1xf32, #tpu.memory_space<smem>>
    %cst_16 = arith.constant 0.000000e+00 : f32
    %20 = vector.broadcast %cst_16 : f32 to vector<8x2xf32>
    %21 = arith.maximumf %18, %20 : vector<8x2xf32>
    %cst_17 = arith.constant 0.000000e+00 : f32
    %22 = vector.broadcast %cst_17 : f32 to vector<8x2xf32>
    %23 = arith.minimumf %18, %22 : vector<8x2xf32>
    %24 = vector.broadcast %19 : f32 to vector<8x2xf32>
    %25 = arith.mulf %24, %23 : vector<8x2xf32>
    %26 = arith.addf %21, %25 : vector<8x2xf32>
    %27 = vector.extract_strided_slice %26 {offsets = [0, 0], sizes = [8, 1], strides = [1, 1]} : vector<8x2xf32> to vector<8x1xf32>
    %c0_18 = arith.constant 0 : index
    %c0_19 = arith.constant 0 : index
    %28 = vector.load %arg8[%c0_18, %c0_19] : memref<2x128xf32, #tpu.memory_space<vmem>>, vector<1x128xf32>
    %29 = vector.broadcast %27 : vector<8x1xf32> to vector<8x128xf32>
    %30 = vector.broadcast %28 : vector<1x128xf32> to vector<8x128xf32>
    %31 = arith.mulf %29, %30 : vector<8x128xf32>
    %32 = vector.extract_strided_slice %26 {offsets = [0, 1], sizes = [8, 1], strides = [1, 1]} : vector<8x2xf32> to vector<8x1xf32>
    %c1 = arith.constant 1 : index
    %c0_20 = arith.constant 0 : index
    %33 = vector.load %arg8[%c1, %c0_20] : memref<2x128xf32, #tpu.memory_space<vmem>>, vector<1x128xf32>
    %34 = vector.broadcast %32 : vector<8x1xf32> to vector<8x128xf32>
    %35 = vector.broadcast %33 : vector<1x128xf32> to vector<8x128xf32>
    %36 = arith.mulf %34, %35 : vector<8x128xf32>
    %37 = arith.addf %31, %36 : vector<8x128xf32>
    %c0_21 = arith.constant 0 : index
    %c0_22 = arith.constant 0 : index
    %38 = vector.load %arg9[%c0_21, %c0_22] : memref<1x128xf32, #tpu.memory_space<vmem>>, vector<1x128xf32>
    %39 = vector.broadcast %38 : vector<1x128xf32> to vector<8x128xf32>
    %40 = arith.addf %37, %39 : vector<8x128xf32>
    %cst_23 = arith.constant dense<0xFF800000> : vector<8xf32>
    %41 = vector.multi_reduction <maximumf>, %40, %cst_23 [1] : vector<8x128xf32> to vector<8xf32>
    %42 = vector.shape_cast %41 : vector<8xf32> to vector<8x1xf32>
    %43 = vector.broadcast %42 : vector<8x1xf32> to vector<8x128xf32>
    %44 = arith.subf %40, %43 : vector<8x128xf32>
    %45 = math.exp %44 : vector<8x128xf32>
    %cst_24 = arith.constant dense<0.000000e+00> : vector<8xf32>
    %46 = vector.multi_reduction <add>, %45, %cst_24 [1] : vector<8x128xf32> to vector<8xf32>
    %47 = vector.shape_cast %46 : vector<8xf32> to vector<8x1xf32>
    %48 = math.log %47 : vector<8x1xf32>
    %49 = vector.broadcast %48 : vector<8x1xf32> to vector<8x128xf32>
    %50 = arith.subf %44, %49 : vector<8x128xf32>
    %c0_25 = arith.constant 0 : index
    %c0_26 = arith.constant 0 : index
    %51 = vector.load %arg10[%c0_25, %c0_26] : memref<8x128xf32, #tpu.memory_space<vmem>>, vector<8x128xf32>
    tpu.vector_store %arg10[%c0_25, %c0_26], %50 {strides = array<i32>} : memref<8x128xf32, #tpu.memory_space<vmem>>, vector<8x128xf32>,
    return
  }
  func.func @transform_0(%arg0: i32) -> (i32, i32) {
    %c0_i32 = arith.constant 0 : i32
    %c0_i32_0 = arith.constant 0 : i32
    return %arg0, %c0_i32 : i32, i32
  }
  func.func @transform_1(%arg0: i32) -> (i32, i32) {
    %c0_i32 = arith.constant 0 : i32
    %c0_i32_0 = arith.constant 0 : i32
    %c0_i32_1 = arith.constant 0 : i32
    return %c0_i32, %c0_i32_0 : i32, i32
  }
  func.func @transform_2(%arg0: i32) -> (i32, i32) {
    %c0_i32 = arith.constant 0 : i32
    %c0_i32_0 = arith.constant 0 : i32
    %c0_i32_1 = arith.constant 0 : i32
    return %c0_i32, %c0_i32_0 : i32, i32
  }
  func.func @transform_3(%arg0: i32) -> (i32, i32) {
    %c0_i32 = arith.constant 0 : i32
    %c0_i32_0 = arith.constant 0 : i32
    %c0_i32_1 = arith.constant 0 : i32
    return %c0_i32, %c0_i32_0 : i32, i32
  }
  func.func @transform_4(%arg0: i32) -> (i32, i32) {
    %c0_i32 = arith.constant 0 : i32
    %c0_i32_0 = arith.constant 0 : i32
    %c0_i32_1 = arith.constant 0 : i32
    return %c0_i32, %c0_i32_0 : i32, i32
  }
  func.func @transform_5(%arg0: i32) -> (i32, i32) {
    %c0_i32 = arith.constant 0 : i32
    %c0_i32_0 = arith.constant 0 : i32
    %c0_i32_1 = arith.constant 0 : i32
    return %c0_i32, %c0_i32_0 : i32, i32
  }
  func.func @transform_6(%arg0: i32) -> (i32, i32) {
    %c0_i32 = arith.constant 0 : i32
    %c0_i32_0 = arith.constant 0 : i32
    %c0_i32_1 = arith.constant 0 : i32
    return %c0_i32, %c0_i32_0 : i32, i32
  }
  func.func @transform_7(%arg0: i32) -> (i32, i32) {
    %c0_i32 = arith.constant 0 : i32
    %c0_i32_0 = arith.constant 0 : i32
    %c0_i32_1 = arith.constant 0 : i32
    return %c0_i32, %c0_i32_0 : i32, i32
  }
  func.func @transform_8(%arg0: i32) -> (i32, i32) {
    %c0_i32 = arith.constant 0 : i32
    %c0_i32_0 = arith.constant 0 : i32
    %c0_i32_1 = arith.constant 0 : i32
    return %c0_i32, %c0_i32_0 : i32, i32
  }
  func.func @transform_9(%arg0: i32) -> (i32, i32) {
    %c0_i32 = arith.constant 0 : i32
    %c0_i32_0 = arith.constant 0 : i32
    return %arg0, %c0_i32 : i32, i32
  }
}

</mosaic_0001>

<llo_original>
// kernel: tpu_custom_call.1
$region0: #{tpu_custom_call.1}
  #allocation0 [shape = 'u32[]', space=smem, size = 0x4, offset = 0x4, fixed_abs, tag = 'smem constant byte address 0x4 - core index']
  #allocation1 [shape = 'u32[144,128]{1,0:T(1,128)}', space=vmem, size = 0x12000, scoped, tag = 'internal scratch']
  #allocation2 [shape = 'f32[1,1]{1,0:T(1,128)S(6)}', space=smem, size = 0x200, scoped, tag = 'scoped memory for tpu_custom_call.1']
  #allocation3 [shape = 'f32[1,1]{1,0:T(1,128)S(6)}', space=smem, size = 0x200, scoped, tag = 'scoped memory for tpu_custom_call.1']
  %s0 = inlined_call_operand.vmem [shape: bf16[8,1024], index: 0, kind: input, shape index: {}]
  %s1 = inlined_call_operand.vmem [shape: bf16[1024,32], index: 1, kind: input, shape index: {}]
  %s2 = inlined_call_operand.vmem [shape: f32[1,32], index: 2, kind: input, shape index: {}]
  %s3 = inlined_call_operand.<no memory space> [shape: f32[1,1], index: 3, kind: input, shape index: {}]
  %s4 = inlined_call_operand.vmem [shape: f32[32,2], index: 4, kind: input, shape index: {}]
  %s5 = inlined_call_operand.vmem [shape: f32[1,2], index: 5, kind: input, shape index: {}]
  %s6 = inlined_call_operand.<no memory space> [shape: f32[1,1], index: 6, kind: input, shape index: {}]
  %s7 = inlined_call_operand.vmem [shape: f32[2,128], index: 7, kind: input, shape index: {}]
  %s8 = inlined_call_operand.vmem [shape: f32[1,128], index: 8, kind: input, shape index: {}]
  %s9 = inlined_call_operand.hbm [shape: f32[8,128], index: 9, kind: output, shape index: {}]
  %s10 = sld [smem:[#allocation0]]
  $region46: #{tpu_custom_call.1} parent=0
    _
  %s12 = ssub.s32 1, %s10
  %s13 = scalar_select 0, %s12, %s10
  %14 = sst [smem:[#allocation2]] %s3
  %15 = sst [smem:[#allocation3]] %s6
  $region1: #{tpu_custom_call.1} parent=0
    #allocation4 [shape = 'u8[4096]{0}', space=vmem, size = 0x1000, scoped, tag = 'output window, operand 0, single buffered']
    #allocation5 [shape = 's32[1]{0}', space=sflag, size = 0x4, scoped, tag = 'scoped memory for tpu_custom_call.1']
    %16 = vsyncpa [#allocation5], 0
    // Predicated region
    $region2: #{tpu_custom_call.1} parent=1 // pred_check
      _
    $region3: #{tpu_custom_call.1} parent=1 // pred_check_branch
      %18 = sbr.rel (0) target = $region5
    $region4: #{tpu_custom_call.1} parent=1 // pred_region
      _
    $region5: #{tpu_custom_call.1} parent=1 // pred_fallthru
      _
    // Predicated region
    $region6: #{tpu_custom_call.1} parent=1 // pred_check
      _
    $region7: #{tpu_custom_call.1} parent=1 // pred_check_branch
      %20 = sbr.rel (0) target = $region9
    $region8: #{tpu_custom_call.1} parent=1 // pred_region
      _
    $region9: #{tpu_custom_call.1} parent=1 // pred_fallthru
      _
    // Predicated region
    $region10: #{tpu_custom_call.1} parent=1 // pred_check
      _
    $region11: #{tpu_custom_call.1} parent=1 // pred_check_branch
      %22 = sbr.rel (0) target = $region13
    $region12: #{tpu_custom_call.1} parent=1 // pred_region
      _
    $region13: #{tpu_custom_call.1} parent=1 // pred_fallthru
      _
    // Predicated region
    $region14: #{tpu_custom_call.1} parent=1 // pred_check
      _
    $region15: #{tpu_custom_call.1} parent=1 // pred_check_branch
      %24 = sbr.rel (0) target = $region17
    $region16: #{tpu_custom_call.1} parent=1 // pred_region
      _
    $region17: #{tpu_custom_call.1} parent=1 // pred_fallthru
      _
    // Predicated region
    $region18: #{tpu_custom_call.1} parent=1 // pred_check
      _
    $region19: #{tpu_custom_call.1} parent=1 // pred_check_branch
      %26 = sbr.rel (0) target = $region21
    $region20: #{tpu_custom_call.1} parent=1 // pred_region
      _
    $region21: #{tpu_custom_call.1} parent=1 // pred_fallthru
      _
    // Predicated region
    $region22: #{tpu_custom_call.1} parent=1 // pred_check
      _
    $region23: #{tpu_custom_call.1} parent=1 // pred_check_branch
      %28 = sbr.rel (0) target = $region25
    $region24: #{tpu_custom_call.1} parent=1 // pred_region
      _
    $region25: #{tpu_custom_call.1} parent=1 // pred_fallthru
      _
    // Predicated region
    $region26: #{tpu_custom_call.1} parent=1 // pred_check
      _
    $region27: #{tpu_custom_call.1} parent=1 // pred_check_branch
      %30 = sbr.rel (0) target = $region29
    $region28: #{tpu_custom_call.1} parent=1 // pred_region
      _
    $region29: #{tpu_custom_call.1} parent=1 // pred_fallthru
      _
    // Predicated region
    $region30: #{tpu_custom_call.1} parent=1 // pred_check
      _
    $region31: #{tpu_custom_call.1} parent=1 // pred_check_branch
      %32 = sbr.rel (0) target = $region33
    $region32: #{tpu_custom_call.1} parent=1 // pred_region
      _
    $region33: #{tpu_custom_call.1} parent=1 // pred_fallthru
      _
    // Predicated region
    $region34: #{tpu_custom_call.1} parent=1 // pred_check
      _
    $region35: #{tpu_custom_call.1} parent=1 // pred_check_branch
      %34 = sbr.rel (0) target = $region37
    $region36: #{tpu_custom_call.1} parent=1 // pred_region
      _
    $region37: #{tpu_custom_call.1} parent=1 // pred_fallthru
      _
    %v36 = vld [vmem:[%s0] sm:$0xff]
    %v37 = vld [vmem:[%s0 + $0x8] sm:$0xff]
    %v38 = vld [vmem:[%s0 + $0x10] sm:$0xff]
    %v39 = vld [vmem:[%s0 + $0x18] sm:$0xff]
    %v40 = vld [vmem:[%s1] sm:$0xf]
    %v41 = vld [vmem:[%s1 + $0x4] sm:$0xf]
    %v42 = vld [vmem:[%s1 + $0x8] sm:$0xf]
    %v43 = vld [vmem:[%s1 + $0xc] sm:$0xf]
    %v44 = vld [vmem:[%s1 + $0x10] sm:$0xf]
    %v45 = vld [vmem:[%s1 + $0x14] sm:$0xf]
    %v46 = vld [vmem:[%s1 + $0x18] sm:$0xf]
    %v47 = vld [vmem:[%s1 + $0x1c] sm:$0xf]
    %v48 = vld [vmem:[%s1 + $0x20] sm:$0xf]
    %v49 = vld [vmem:[%s1 + $0x24] sm:$0xf]
    %v50 = vld [vmem:[%s1 + $0x28] sm:$0xf]
    %v51 = vld [vmem:[%s1 + $0x2c] sm:$0xf]
    %v52 = vld [vmem:[%s1 + $0x30] sm:$0xf]
    %v53 = vld [vmem:[%s1 + $0x34] sm:$0xf]
    %v54 = vld [vmem:[%s1 + $0x38] sm:$0xf]
    %v55 = vld [vmem:[%s1 + $0x3c] sm:$0xf]
    %v56 = vld [vmem:[%s1 + $0x40] sm:$0xf]
    %v57 = vld [vmem:[%s1 + $0x44] sm:$0xf]
    %v58 = vld [vmem:[%s1 + $0x48] sm:$0xf]
    %v59 = vld [vmem:[%s1 + $0x4c] sm:$0xf]
    %v60 = vld [vmem:[%s1 + $0x50] sm:$0xf]
    %v61 = vld [vmem:[%s1 + $0x54] sm:$0xf]
    %v62 = vld [vmem:[%s1 + $0x58] sm:$0xf]
    %v63 = vld [vmem:[%s1 + $0x5c] sm:$0xf]
    %v64 = vld [vmem:[%s1 + $0x60] sm:$0xf]
    %v65 = vld [vmem:[%s1 + $0x64] sm:$0xf]
    %v66 = vld [vmem:[%s1 + $0x68] sm:$0xf]
    %v67 = vld [vmem:[%s1 + $0x6c] sm:$0xf]
    %v68 = vld [vmem:[%s1 + $0x70] sm:$0xf]
    %v69 = vld [vmem:[%s1 + $0x74] sm:$0xf]
    %v70 = vld [vmem:[%s1 + $0x78] sm:$0xf]
    %v71 = vld [vmem:[%s1 + $0x7c] sm:$0xf]
    %v72 = vld [vmem:[%s1 + $0x80] sm:$0xf]
    %v73 = vld [vmem:[%s1 + $0x84] sm:$0xf]
    %v74 = vld [vmem:[%s1 + $0x88] sm:$0xf]
    %v75 = vld [vmem:[%s1 + $0x8c] sm:$0xf]
    %v76 = vld [vmem:[%s1 + $0x90] sm:$0xf]
    %v77 = vld [vmem:[%s1 + $0x94] sm:$0xf]
    %v78 = vld [vmem:[%s1 + $0x98] sm:$0xf]
    %v79 = vld [vmem:[%s1 + $0x9c] sm:$0xf]
    %v80 = vld [vmem:[%s1 + $0xa0] sm:$0xf]
    %v81 = vld [vmem:[%s1 + $0xa4] sm:$0xf]
    %v82 = vld [vmem:[%s1 + $0xa8] sm:$0xf]
    %v83 = vld [vmem:[%s1 + $0xac] sm:$0xf]
    %v84 = vld [vmem:[%s1 + $0xb0] sm:$0xf]
    %v85 = vld [vmem:[%s1 + $0xb4] sm:$0xf]
    %v86 = vld [vmem:[%s1 + $0xb8] sm:$0xf]
    %v87 = vld [vmem:[%s1 + $0xbc] sm:$0xf]
    %v88 = vld [vmem:[%s1 + $0xc0] sm:$0xf]
    %v89 = vld [vmem:[%s1 + $0xc4] sm:$0xf]
    %v90 = vld [vmem:[%s1 + $0xc8] sm:$0xf]
    %v91 = vld [vmem:[%s1 + $0xcc] sm:$0xf]
    %v92 = vld [vmem:[%s1 + $0xd0] sm:$0xf]
    %v93 = vld [vmem:[%s1 + $0xd4] sm:$0xf]
    %v94 = vld [vmem:[%s1 + $0xd8] sm:$0xf]
    %v95 = vld [vmem:[%s1 + $0xdc] sm:$0xf]
    %v96 = vld [vmem:[%s1 + $0xe0] sm:$0xf]
    %v97 = vld [vmem:[%s1 + $0xe4] sm:$0xf]
    %v98 = vld [vmem:[%s1 + $0xe8] sm:$0xf]
    %v99 = vld [vmem:[%s1 + $0xec] sm:$0xf]
    %v100 = vld [vmem:[%s1 + $0xf0] sm:$0xf]
    %v101 = vld [vmem:[%s1 + $0xf4] sm:$0xf]
    %v102 = vld [vmem:[%s1 + $0xf8] sm:$0xf]
    %v103 = vld [vmem:[%s1 + $0xfc] sm:$0xf]
    %v104 = vld [vmem:[%s1 + $0x100] sm:$0xf]
    %v105 = vld [vmem:[%s1 + $0x104] sm:$0xf]
    %v106 = vld [vmem:[%s1 + $0x108] sm:$0xf]
    %v107 = vld [vmem:[%s1 + $0x10c] sm:$0xf]
    %v108 = vld [vmem:[%s1 + $0x110] sm:$0xf]
    %v109 = vld [vmem:[%s1 + $0x114] sm:$0xf]
    %v110 = vld [vmem:[%s1 + $0x118] sm:$0xf]
    %v111 = vld [vmem:[%s1 + $0x11c] sm:$0xf]
    %v112 = vld [vmem:[%s1 + $0x120] sm:$0xf]
    %v113 = vld [vmem:[%s1 + $0x124] sm:$0xf]
    %v114 = vld [vmem:[%s1 + $0x128] sm:$0xf]
    %v115 = vld [vmem:[%s1 + $0x12c] sm:$0xf]
    %v116 = vld [vmem:[%s1 + $0x130] sm:$0xf]
    %v117 = vld [vmem:[%s1 + $0x134] sm:$0xf]
    %v118 = vld [vmem:[%s1 + $0x138] sm:$0xf]
    %v119 = vld [vmem:[%s1 + $0x13c] sm:$0xf]
    %v120 = vld [vmem:[%s1 + $0x140] sm:$0xf]
    %v121 = vld [vmem:[%s1 + $0x144] sm:$0xf]
    %v122 = vld [vmem:[%s1 + $0x148] sm:$0xf]
    %v123 = vld [vmem:[%s1 + $0x14c] sm:$0xf]
    %v124 = vld [vmem:[%s1 + $0x150] sm:$0xf]
    %v125 = vld [vmem:[%s1 + $0x154] sm:$0xf]
    %v126 = vld [vmem:[%s1 + $0x158] sm:$0xf]
    %v127 = vld [vmem:[%s1 + $0x15c] sm:$0xf]
    %v128 = vld [vmem:[%s1 + $0x160] sm:$0xf]
    %v129 = vld [vmem:[%s1 + $0x164] sm:$0xf]
    %v130 = vld [vmem:[%s1 + $0x168] sm:$0xf]
    %v131 = vld [vmem:[%s1 + $0x16c] sm:$0xf]
    %v132 = vld [vmem:[%s1 + $0x170] sm:$0xf]
    %v133 = vld [vmem:[%s1 + $0x174] sm:$0xf]
    %v134 = vld [vmem:[%s1 + $0x178] sm:$0xf]
    %v135 = vld [vmem:[%s1 + $0x17c] sm:$0xf]
    %v136 = vld [vmem:[%s1 + $0x180] sm:$0xf]
    %v137 = vld [vmem:[%s1 + $0x184] sm:$0xf]
    %v138 = vld [vmem:[%s1 + $0x188] sm:$0xf]
    %v139 = vld [vmem:[%s1 + $0x18c] sm:$0xf]
    %v140 = vld [vmem:[%s1 + $0x190] sm:$0xf]
    %v141 = vld [vmem:[%s1 + $0x194] sm:$0xf]
    %v142 = vld [vmem:[%s1 + $0x198] sm:$0xf]
    %v143 = vld [vmem:[%s1 + $0x19c] sm:$0xf]
    %v144 = vld [vmem:[%s1 + $0x1a0] sm:$0xf]
    %v145 = vld [vmem:[%s1 + $0x1a4] sm:$0xf]
    %v146 = vld [vmem:[%s1 + $0x1a8] sm:$0xf]
    %v147 = vld [vmem:[%s1 + $0x1ac] sm:$0xf]
    %v148 = vld [vmem:[%s1 + $0x1b0] sm:$0xf]
    %v149 = vld [vmem:[%s1 + $0x1b4] sm:$0xf]
    %v150 = vld [vmem:[%s1 + $0x1b8] sm:$0xf]
    %v151 = vld [vmem:[%s1 + $0x1bc] sm:$0xf]
    %v152 = vld [vmem:[%s1 + $0x1c0] sm:$0xf]
    %v153 = vld [vmem:[%s1 + $0x1c4] sm:$0xf]
    %v154 = vld [vmem:[%s1 + $0x1c8] sm:$0xf]
    %v155 = vld [vmem:[%s1 + $0x1cc] sm:$0xf]
    %v156 = vld [vmem:[%s1 + $0x1d0] sm:$0xf]
    %v157 = vld [vmem:[%s1 + $0x1d4] sm:$0xf]
    %v158 = vld [vmem:[%s1 + $0x1d8] sm:$0xf]
    %v159 = vld [vmem:[%s1 + $0x1dc] sm:$0xf]
    %v160 = vld [vmem:[%s1 + $0x1e0] sm:$0xf]
    %v161 = vld [vmem:[%s1 + $0x1e4] sm:$0xf]
    %v162 = vld [vmem:[%s1 + $0x1e8] sm:$0xf]
    %v163 = vld [vmem:[%s1 + $0x1ec] sm:$0xf]
    %v164 = vld [vmem:[%s1 + $0x1f0] sm:$0xf]
    %v165 = vld [vmem:[%s1 + $0x1f4] sm:$0xf]
    %v166 = vld [vmem:[%s1 + $0x1f8] sm:$0xf]
    %v167 = vld [vmem:[%s1 + $0x1fc] sm:$0xf]
    %v168 = vld [vmem:[%s2] sm:$0x1]
    %v170 = vlaneseq
    %v171 = vshrl.u32 %v170, 7
    %v172 = vsub.s32 0, %v171
    %v173 = vrot.slane %v168, %v172
    %v179 = vunpack.c.l.b16 %v36
    %v180 = vunpack.c.h.b16 %v36
    %v181 = vunpack.c.l.b16 %v37
    %v182 = vunpack.c.h.b16 %v37
    %v183 = vunpack.c.l.b16 %v38
    %v184 = vunpack.c.h.b16 %v38
    %v185 = vunpack.c.l.b16 %v39
    %v186 = vunpack.c.h.b16 %v39
    %v187 = vpack.c.b16 %v179, %v179
    %v188 = vpack.c.b16 %v180, %v180
    %v189 = vpack.c.b16 %v181, %v181
    %v190 = vpack.c.b16 %v182, %v182
    %v191 = vpack.c.b16 %v183, %v183
    %v192 = vpack.c.b16 %v184, %v184
    %v193 = vpack.c.b16 %v185, %v185
    %v194 = vpack.c.b16 %v186, %v186
    %v331 = vunpack.c.l.b16 %v40
    %v332 = vunpack.c.l.b16 %v41
    %v333 = vunpack.c.l.b16 %v42
    %v334 = vunpack.c.l.b16 %v43
    %v335 = vunpack.c.l.b16 %v44
    %v336 = vunpack.c.l.b16 %v45
    %v337 = vunpack.c.l.b16 %v46
    %v338 = vunpack.c.l.b16 %v47
    %v339 = vunpack.c.l.b16 %v48
    %v340 = vunpack.c.l.b16 %v49
    %v341 = vunpack.c.l.b16 %v50
    %v342 = vunpack.c.l.b16 %v51
    %v343 = vunpack.c.l.b16 %v52
    %v344 = vunpack.c.l.b16 %v53
    %v345 = vunpack.c.l.b16 %v54
    %v346 = vunpack.c.l.b16 %v55
    %v347 = vunpack.c.l.b16 %v56
    %v348 = vunpack.c.l.b16 %v57
    %v349 = vunpack.c.l.b16 %v58
    %v350 = vunpack.c.l.b16 %v59
    %v351 = vunpack.c.l.b16 %v60
    %v352 = vunpack.c.l.b16 %v61
    %v353 = vunpack.c.l.b16 %v62
    %v354 = vunpack.c.l.b16 %v63
    %v355 = vunpack.c.l.b16 %v64
    %v356 = vunpack.c.l.b16 %v65
    %v357 = vunpack.c.l.b16 %v66
    %v358 = vunpack.c.l.b16 %v67
    %v359 = vunpack.c.l.b16 %v68
    %v360 = vunpack.c.l.b16 %v69
    %v361 = vunpack.c.l.b16 %v70
    %v362 = vunpack.c.l.b16 %v71
    %v363 = vunpack.c.l.b16 %v72
    %v364 = vunpack.c.l.b16 %v73
    %v365 = vunpack.c.l.b16 %v74
    %v366 = vunpack.c.l.b16 %v75
    %v367 = vunpack.c.l.b16 %v76
    %v368 = vunpack.c.l.b16 %v77
    %v369 = vunpack.c.l.b16 %v78
    %v370 = vunpack.c.l.b16 %v79
    %v371 = vunpack.c.l.b16 %v80
    %v372 = vunpack.c.l.b16 %v81
    %v373 = vunpack.c.l.b16 %v82
    %v374 = vunpack.c.l.b16 %v83
    %v375 = vunpack.c.l.b16 %v84
    %v376 = vunpack.c.l.b16 %v85
    %v377 = vunpack.c.l.b16 %v86
    %v378 = vunpack.c.l.b16 %v87
    %v379 = vunpack.c.l.b16 %v88
    %v380 = vunpack.c.l.b16 %v89
    %v381 = vunpack.c.l.b16 %v90
    %v382 = vunpack.c.l.b16 %v91
    %v383 = vunpack.c.l.b16 %v92
    %v384 = vunpack.c.l.b16 %v93
    %v385 = vunpack.c.l.b16 %v94
    %v386 = vunpack.c.l.b16 %v95
    %v387 = vunpack.c.l.b16 %v96
    %v388 = vunpack.c.l.b16 %v97
    %v389 = vunpack.c.l.b16 %v98
    %v390 = vunpack.c.l.b16 %v99
    %v391 = vunpack.c.l.b16 %v100
    %v392 = vunpack.c.l.b16 %v101
    %v393 = vunpack.c.l.b16 %v102
    %v394 = vunpack.c.l.b16 %v103
    %v395 = vunpack.c.l.b16 %v104
    %v396 = vunpack.c.l.b16 %v105
    %v397 = vunpack.c.l.b16 %v106
    %v398 = vunpack.c.l.b16 %v107
    %v399 = vunpack.c.l.b16 %v108
    %v400 = vunpack.c.l.b16 %v109
    %v401 = vunpack.c.l.b16 %v110
    %v402 = vunpack.c.l.b16 %v111
    %v403 = vunpack.c.l.b16 %v112
    %v404 = vunpack.c.l.b16 %v113
    %v405 = vunpack.c.l.b16 %v114
    %v406 = vunpack.c.l.b16 %v115
    %v407 = vunpack.c.l.b16 %v116
    %v408 = vunpack.c.l.b16 %v117
    %v409 = vunpack.c.l.b16 %v118
    %v410 = vunpack.c.l.b16 %v119
    %v411 = vunpack.c.l.b16 %v120
    %v412 = vunpack.c.l.b16 %v121
    %v413 = vunpack.c.l.b16 %v122
    %v414 = vunpack.c.l.b16 %v123
    %v415 = vunpack.c.l.b16 %v124
    %v416 = vunpack.c.l.b16 %v125
    %v417 = vunpack.c.l.b16 %v126
    %v418 = vunpack.c.l.b16 %v127
    %v419 = vunpack.c.l.b16 %v128
    %v420 = vunpack.c.l.b16 %v129
    %v421 = vunpack.c.l.b16 %v130
    %v422 = vunpack.c.l.b16 %v131
    %v423 = vunpack.c.l.b16 %v132
    %v424 = vunpack.c.l.b16 %v133
    %v425 = vunpack.c.l.b16 %v134
    %v426 = vunpack.c.l.b16 %v135
    %v427 = vunpack.c.l.b16 %v136
    %v428 = vunpack.c.l.b16 %v137
    %v429 = vunpack.c.l.b16 %v138
    %v430 = vunpack.c.l.b16 %v139
    %v431 = vunpack.c.l.b16 %v140
    %v432 = vunpack.c.l.b16 %v141
    %v433 = vunpack.c.l.b16 %v142
    %v434 = vunpack.c.l.b16 %v143
    %v435 = vunpack.c.l.b16 %v144
    %v436 = vunpack.c.l.b16 %v145
    %v437 = vunpack.c.l.b16 %v146
    %v438 = vunpack.c.l.b16 %v147
    %v439 = vunpack.c.l.b16 %v148
    %v440 = vunpack.c.l.b16 %v149
    %v441 = vunpack.c.l.b16 %v150
    %v442 = vunpack.c.l.b16 %v151
    %v443 = vunpack.c.l.b16 %v152
    %v444 = vunpack.c.l.b16 %v153
    %v445 = vunpack.c.l.b16 %v154
    %v446 = vunpack.c.l.b16 %v155
    %v447 = vunpack.c.l.b16 %v156
    %v448 = vunpack.c.l.b16 %v157
    %v449 = vunpack.c.l.b16 %v158
    %v450 = vunpack.c.l.b16 %v159
    %v451 = vunpack.c.l.b16 %v160
    %v452 = vunpack.c.l.b16 %v161
    %v453 = vunpack.c.l.b16 %v162
    %v454 = vunpack.c.l.b16 %v163
    %v455 = vunpack.c.l.b16 %v164
    %v456 = vunpack.c.l.b16 %v165
    %v457 = vunpack.c.l.b16 %v166
    %v458 = vunpack.c.l.b16 %v167
    %v459 = vpack.c.b16 %v332, %v331
    %v460 = vpack.c.b16 %v334, %v333
    %v461 = vpack.c.b16 %v336, %v335
    %v462 = vpack.c.b16 %v338, %v337
    %v463 = vpack.c.b16 %v340, %v339
    %v464 = vpack.c.b16 %v342, %v341
    %v465 = vpack.c.b16 %v344, %v343
    %v466 = vpack.c.b16 %v346, %v345
    %v467 = vpack.c.b16 %v348, %v347
    %v468 = vpack.c.b16 %v350, %v349
    %v469 = vpack.c.b16 %v352, %v351
    %v470 = vpack.c.b16 %v354, %v353
    %v471 = vpack.c.b16 %v356, %v355
    %v472 = vpack.c.b16 %v358, %v357
    %v473 = vpack.c.b16 %v360, %v359
    %v474 = vpack.c.b16 %v362, %v361
    %v475 = vpack.c.b16 %v364, %v363
    %v476 = vpack.c.b16 %v366, %v365
    %v477 = vpack.c.b16 %v368, %v367
    %v478 = vpack.c.b16 %v370, %v369
    %v479 = vpack.c.b16 %v372, %v371
    %v480 = vpack.c.b16 %v374, %v373
    %v481 = vpack.c.b16 %v376, %v375
    %v482 = vpack.c.b16 %v378, %v377
    %v483 = vpack.c.b16 %v380, %v379
    %v484 = vpack.c.b16 %v382, %v381
    %v485 = vpack.c.b16 %v384, %v383
    %v486 = vpack.c.b16 %v386, %v385
    %v487 = vpack.c.b16 %v388, %v387
    %v488 = vpack.c.b16 %v390, %v389
    %v489 = vpack.c.b16 %v392, %v391
    %v490 = vpack.c.b16 %v394, %v393
    %v491 = vpack.c.b16 %v396, %v395
    %v492 = vpack.c.b16 %v398, %v397
    %v493 = vpack.c.b16 %v400, %v399
    %v494 = vpack.c.b16 %v402, %v401
    %v495 = vpack.c.b16 %v404, %v403
    %v496 = vpack.c.b16 %v406, %v405
    %v497 = vpack.c.b16 %v408, %v407
    %v498 = vpack.c.b16 %v410, %v409
    %v499 = vpack.c.b16 %v412, %v411
    %v500 = vpack.c.b16 %v414, %v413
    %v501 = vpack.c.b16 %v416, %v415
    %v502 = vpack.c.b16 %v418, %v417
    %v503 = vpack.c.b16 %v420, %v419
    %v504 = vpack.c.b16 %v422, %v421
    %v505 = vpack.c.b16 %v424, %v423
    %v506 = vpack.c.b16 %v426, %v425
    %v507 = vpack.c.b16 %v428, %v427
    %v508 = vpack.c.b16 %v430, %v429
    %v509 = vpack.c.b16 %v432, %v431
    %v510 = vpack.c.b16 %v434, %v433
    %v511 = vpack.c.b16 %v436, %v435
    %v512 = vpack.c.b16 %v438, %v437
    %v513 = vpack.c.b16 %v440, %v439
    %v514 = vpack.c.b16 %v442, %v441
    %v515 = vpack.c.b16 %v444, %v443
    %v516 = vpack.c.b16 %v446, %v445
    %v517 = vpack.c.b16 %v448, %v447
    %v518 = vpack.c.b16 %v450, %v449
    %v519 = vpack.c.b16 %v452, %v451
    %v520 = vpack.c.b16 %v454, %v453
    %v521 = vpack.c.b16 %v456, %v455
    %v522 = vpack.c.b16 %v458, %v457
    %587 = vmatprep.subr.bf16.mxu0 0
    %588 = vmatpush1.bf16.msra.mxu0 %v466
    %589 = vmatprep.subr.bf16.mxu0 0
    %590 = vmatpush1.bf16.msra.mxu0 %v465
    %591 = vmatprep.subr.bf16.mxu0 0
    %592 = vmatpush1.bf16.msra.mxu0 %v464
    %593 = vmatprep.subr.bf16.mxu0 0
    %594 = vmatpush1.bf16.msra.mxu0 %v463
    %595 = vmatprep.subr.bf16.mxu0 0
    %596 = vmatpush1.bf16.msra.mxu0 %v462
    %597 = vmatprep.subr.bf16.mxu0 0
    %598 = vmatpush1.bf16.msra.mxu0 %v461
    %599 = vmatprep.subr.bf16.mxu0 0
    %600 = vmatpush1.bf16.msra.mxu0 %v460
    %601 = vmatprep.subr.bf16.mxu0 0
    %602 = vmatpush1.bf16.msra.mxu0 %v459
    %603 = vmatprep.subr.bf16.mxu0 0
    %604 = vmatpush2.bf16.msra.mxu0 %v474
    %605 = vmatprep.subr.bf16.mxu0 0
    %606 = vmatpush2.bf16.msra.mxu0 %v473
    %607 = vmatprep.subr.bf16.mxu0 0
    %608 = vmatpush2.bf16.msra.mxu0 %v472
    %609 = vmatprep.subr.bf16.mxu0 0
    %610 = vmatpush2.bf16.msra.mxu0 %v471
    %611 = vmatprep.subr.bf16.mxu0 0
    %612 = vmatpush2.bf16.msra.mxu0 %v470
    %613 = vmatprep.subr.bf16.mxu0 0
    %614 = vmatpush2.bf16.msra.mxu0 %v469
    %615 = vmatprep.subr.bf16.mxu0 0
    %616 = vmatpush2.bf16.msra.mxu0 %v468
    %617 = vmatprep.subr.bf16.mxu0 0
    %618 = vmatpush2.bf16.msra.mxu0 %v467
    %619 = vmatprep.mubr.bf16.mxu0 %v188
    %620 = vmatmul.mubr.bf16.gmra.mxu0 %v187
    %v621 = vpop.f32.mrf.mxu0
    %v622 = vadd.f32 %v173, %v621
    %v623 = vpop.f32.mrf.mxu0
    %v624 = vpop.f32.mrf.mxu0
    %v625 = vpop.f32.mrf.mxu0
    %626 = vdwg.mxu0
    %627 = vmatprep.subr.bf16.mxu0 0
    %628 = vmatpush1.bf16.msra.mxu0 %v482
    %629 = vmatprep.subr.bf16.mxu0 0
    %630 = vmatpush1.bf16.msra.mxu0 %v481
    %631 = vmatprep.subr.bf16.mxu0 0
    %632 = vmatpush1.bf16.msra.mxu0 %v480
    %633 = vmatprep.subr.bf16.mxu0 0
    %634 = vmatpush1.bf16.msra.mxu0 %v479
    %635 = vmatprep.subr.bf16.mxu0 0
    %636 = vmatpush1.bf16.msra.mxu0 %v478
    %637 = vmatprep.subr.bf16.mxu0 0
    %638 = vmatpush1.bf16.msra.mxu0 %v477
    %639 = vmatprep.subr.bf16.mxu0 0
    %640 = vmatpush1.bf16.msra.mxu0 %v476
    %641 = vmatprep.subr.bf16.mxu0 0
    %642 = vmatpush1.bf16.msra.mxu0 %v475
    %643 = vmatprep.subr.bf16.mxu0 0
    %644 = vmatpush2.bf16.msra.mxu0 %v490
    %645 = vmatprep.subr.bf16.mxu0 0
    %646 = vmatpush2.bf16.msra.mxu0 %v489
    %647 = vmatprep.subr.bf16.mxu0 0
    %648 = vmatpush2.bf16.msra.mxu0 %v488
    %649 = vmatprep.subr.bf16.mxu0 0
    %650 = vmatpush2.bf16.msra.mxu0 %v487
    %651 = vmatprep.subr.bf16.mxu0 0
    %652 = vmatpush2.bf16.msra.mxu0 %v486
    %653 = vmatprep.subr.bf16.mxu0 0
    %654 = vmatpush2.bf16.msra.mxu0 %v485
    %655 = vmatprep.subr.bf16.mxu0 0
    %656 = vmatpush2.bf16.msra.mxu0 %v484
    %657 = vmatprep.subr.bf16.mxu0 0
    %658 = vmatpush2.bf16.msra.mxu0 %v483
    %659 = vmatprep.mubr.bf16.mxu0 %v190
    %660 = vmatmul.mubr.bf16.gmra.mxu0 %v189
    %v661 = vpop.f32.mrf.mxu0
    %v662 = vadd.f32 %v622, %v661
    %v663 = vpop.f32.mrf.mxu0
    %v664 = vpop.f32.mrf.mxu0
    %v665 = vpop.f32.mrf.mxu0
    %666 = vdwg.mxu0
    %667 = vmatprep.subr.bf16.mxu0 0
    %668 = vmatpush1.bf16.msra.mxu0 %v498
    %669 = vmatprep.subr.bf16.mxu0 0
    %670 = vmatpush1.bf16.msra.mxu0 %v497
    %671 = vmatprep.subr.bf16.mxu0 0
    %672 = vmatpush1.bf16.msra.mxu0 %v496
    %673 = vmatprep.subr.bf16.mxu0 0
    %674 = vmatpush1.bf16.msra.mxu0 %v495
    %675 = vmatprep.subr.bf16.mxu0 0
    %676 = vmatpush1.bf16.msra.mxu0 %v494
    %677 = vmatprep.subr.bf16.mxu0 0
    %678 = vmatpush1.bf16.msra.mxu0 %v493
    %679 = vmatprep.subr.bf16.mxu0 0
    %680 = vmatpush1.bf16.msra.mxu0 %v492
    %681 = vmatprep.subr.bf16.mxu0 0
    %682 = vmatpush1.bf16.msra.mxu0 %v491
    %683 = vmatprep.subr.bf16.mxu0 0
    %684 = vmatpush2.bf16.msra.mxu0 %v506
    %685 = vmatprep.subr.bf16.mxu0 0
    %686 = vmatpush2.bf16.msra.mxu0 %v505
    %687 = vmatprep.subr.bf16.mxu0 0
    %688 = vmatpush2.bf16.msra.mxu0 %v504
    %689 = vmatprep.subr.bf16.mxu0 0
    %690 = vmatpush2.bf16.msra.mxu0 %v503
    %691 = vmatprep.subr.bf16.mxu0 0
    %692 = vmatpush2.bf16.msra.mxu0 %v502
    %693 = vmatprep.subr.bf16.mxu0 0
    %694 = vmatpush2.bf16.msra.mxu0 %v501
    %695 = vmatprep.subr.bf16.mxu0 0
    %696 = vmatpush2.bf16.msra.mxu0 %v500
    %697 = vmatprep.subr.bf16.mxu0 0
    %698 = vmatpush2.bf16.msra.mxu0 %v499
    %699 = vmatprep.mubr.bf16.mxu0 %v192
    %700 = vmatmul.mubr.bf16.gmra.mxu0 %v191
    %v701 = vpop.f32.mrf.mxu0
    %v702 = vadd.f32 %v662, %v701
    %v703 = vpop.f32.mrf.mxu0
    %v704 = vpop.f32.mrf.mxu0
    %v705 = vpop.f32.mrf.mxu0
    %706 = vdwg.mxu0
    %707 = vmatprep.subr.bf16.mxu0 0
    %708 = vmatpush1.bf16.msra.mxu0 %v514
    %709 = vmatprep.subr.bf16.mxu0 0
    %710 = vmatpush1.bf16.msra.mxu0 %v513
    %711 = vmatprep.subr.bf16.mxu0 0
    %712 = vmatpush1.bf16.msra.mxu0 %v512
    %713 = vmatprep.subr.bf16.mxu0 0
    %714 = vmatpush1.bf16.msra.mxu0 %v511
    %715 = vmatprep.subr.bf16.mxu0 0
    %716 = vmatpush1.bf16.msra.mxu0 %v510
    %717 = vmatprep.subr.bf16.mxu0 0
    %718 = vmatpush1.bf16.msra.mxu0 %v509
    %719 = vmatprep.subr.bf16.mxu0 0
    %720 = vmatpush1.bf16.msra.mxu0 %v508
    %721 = vmatprep.subr.bf16.mxu0 0
    %722 = vmatpush1.bf16.msra.mxu0 %v507
    %723 = vmatprep.subr.bf16.mxu0 0
    %724 = vmatpush2.bf16.msra.mxu0 %v522
    %725 = vmatprep.subr.bf16.mxu0 0
    %726 = vmatpush2.bf16.msra.mxu0 %v521
    %727 = vmatprep.subr.bf16.mxu0 0
    %728 = vmatpush2.bf16.msra.mxu0 %v520
    %729 = vmatprep.subr.bf16.mxu0 0
    %730 = vmatpush2.bf16.msra.mxu0 %v519
    %731 = vmatprep.subr.bf16.mxu0 0
    %732 = vmatpush2.bf16.msra.mxu0 %v518
    %733 = vmatprep.subr.bf16.mxu0 0
    %734 = vmatpush2.bf16.msra.mxu0 %v517
    %735 = vmatprep.subr.bf16.mxu0 0
    %736 = vmatpush2.bf16.msra.mxu0 %v516
    %737 = vmatprep.subr.bf16.mxu0 0
    %738 = vmatpush2.bf16.msra.mxu0 %v515
    %739 = vmatprep.mubr.bf16.mxu0 %v194
    %740 = vmatmul.mubr.bf16.gmra.mxu0 %v193
    %v741 = vpop.f32.mrf.mxu0
    %v742 = vadd.f32 %v702, %v741
    %v743 = vpop.f32.mrf.mxu0
    %v744 = vpop.f32.mrf.mxu0
    %v745 = vpop.f32.mrf.mxu0
    %746 = vdwg.mxu0
    %s747 = sld [smem:[#allocation2]]
    %v748 = vmax.f32 %v742, 0.0
    %v749 = vmin.f32 %v742, 0.0
    %v750 = vstv %s747
    %v751 = vmul.f32 %v750, %v749
    %v752 = vadd.f32 %v748, %v751
    %v753 = vld [vmem:[%s4] sm:$0xff]
    %v754 = vld [vmem:[%s4 + $0x8] sm:$0xff]
    %v755 = vld [vmem:[%s4 + $0x10] sm:$0xff]
    %v756 = vld [vmem:[%s4 + $0x18] sm:$0xff]
    %v757 = vld [vmem:[%s5] sm:$0x1]
    %v759 = vlaneseq
    %v760 = vshrl.u32 %v759, 7
    %v761 = vsub.s32 0, %v760
    %v762 = vrot.slane %v757, %v761
    %vm764 = vcmask 261120
    %v766 = vsel %vm764, %v752, 0
    %768 = vmatprep.subr.mxu0 0.0
    %769 = vmatpush1.msra.mxu0 0.0
    %770 = vmatprep.subr.mxu0 0.0
    %771 = vmatpush1.msra.mxu0 0.0
    %772 = vmatprep.subr.mxu0 0.0
    %773 = vmatpush1.msra.mxu0 0.0
    %774 = vmatprep.subr.mxu0 0.0
    %775 = vmatpush1.msra.mxu0 0.0
    %776 = vmatprep.subr.mxu0 0.0
    %777 = vmatpush1.msra.mxu0 0.0
    %778 = vmatprep.subr.mxu0 0.0
    %779 = vmatpush1.msra.mxu0 0.0
    %780 = vmatprep.subr.mxu0 0.0
    %781 = vmatpush1.msra.mxu0 0.0
    %782 = vmatprep.subr.mxu0 0.0
    %783 = vmatpush1.msra.mxu0 0.0
    %784 = vmatprep.subr.mxu0 0.0
    %785 = vmatpush1.msra.mxu0 0.0
    %786 = vmatprep.subr.mxu0 0.0
    %787 = vmatpush1.msra.mxu0 0.0
    %788 = vmatprep.subr.mxu0 0.0
    %789 = vmatpush1.msra.mxu0 0.0
    %790 = vmatprep.subr.mxu0 0.0
    %791 = vmatpush1.msra.mxu0 0.0
    %792 = vmatprep.subr.mxu0 0.0
    %793 = vmatpush1.msra.mxu0 %v756
    %794 = vmatprep.subr.mxu0 0.0
    %795 = vmatpush1.msra.mxu0 %v755
    %796 = vmatprep.subr.mxu0 0.0
    %797 = vmatpush1.msra.mxu0 %v754
    %798 = vmatprep.subr.mxu0 0.0
    %799 = vmatpush1.msra.mxu0 %v753
    %800 = vmatprep.subr.mxu0 0.0
    %801 = vmatpush2.msra.mxu0 0.0
    %802 = vmatprep.subr.mxu0 0.0
    %803 = vmatpush2.msra.mxu0 0.0
    %804 = vmatprep.subr.mxu0 0.0
    %805 = vmatpush2.msra.mxu0 0.0
    %806 = vmatprep.subr.mxu0 0.0
    %807 = vmatpush2.msra.mxu0 0.0
    %808 = vmatprep.subr.mxu0 0.0
    %809 = vmatpush2.msra.mxu0 0.0
    %810 = vmatprep.subr.mxu0 0.0
    %811 = vmatpush2.msra.mxu0 0.0
    %812 = vmatprep.subr.mxu0 0.0
    %813 = vmatpush2.msra.mxu0 0.0
    %814 = vmatprep.subr.mxu0 0.0
    %815 = vmatpush2.msra.mxu0 0.0
    %816 = vmatprep.subr.mxu0 0.0
    %817 = vmatpush2.msra.mxu0 0.0
    %818 = vmatprep.subr.mxu0 0.0
    %819 = vmatpush2.msra.mxu0 0.0
    %820 = vmatprep.subr.mxu0 0.0
    %821 = vmatpush2.msra.mxu0 0.0
    %822 = vmatprep.subr.mxu0 0.0
    %823 = vmatpush2.msra.mxu0 0.0
    %824 = vmatprep.subr.mxu0 0.0
    %825 = vmatpush2.msra.mxu0 0.0
    %826 = vmatprep.subr.mxu0 0.0
    %827 = vmatpush2.msra.mxu0 0.0
    %828 = vmatprep.subr.mxu0 0.0
    %829 = vmatpush2.msra.mxu0 0.0
    %830 = vmatprep.subr.mxu0 0.0
    %831 = vmatpush2.msra.mxu0 0.0
    %832 = vmatprep.mubr.f32.mxu0 0.0
    %833 = vmatmul.mubr.f32.gmra.mxu0 %v766
    %v834 = vpop.f32.mrf.mxu0
    %v835 = vadd.f32 %v762, %v834
    %v836 = vpop.f32.mrf.mxu0
    %837 = vdwg.mxu0
    %s838 = sld [smem:[#allocation3]]
    %v839 = vmax.f32 %v835, 0.0
    %v840 = vmin.f32 %v835, 0.0
    %v841 = vstv %s838
    %v842 = vmul.f32 %v841, %v840
    %v843 = vadd.f32 %v839, %v842
    %v844 = vld [vmem:[%s7] sm:$0x1]
    %846 = vset.pattern.permute.xlu0 0
    %847 = vperm.xlu0 %846, %v843
    %v848 = vpop.permute.xlu0 %847
    %v850 = vlaneseq
    %v851 = vshrl.u32 %v850, 7
    %v852 = vsub.s32 0, %v851
    %v853 = vrot.slane %v844, %v852
    %v854 = vmul.f32 %v848, %v853
    %v855 = vld [vmem:[%s7 + $0x1] sm:$0x1]
    %856 = vset.pattern.permute.xlu0 1
    %857 = vperm.xlu0 %856, %v843
    %v858 = vpop.permute.xlu0 %857
    %v860 = vlaneseq
    %v861 = vshrl.u32 %v860, 7
    %v862 = vsub.s32 0, %v861
    %v863 = vrot.slane %v855, %v862
    %v864 = vmul.f32 %v858, %v863
    %v865 = vadd.f32 %v854, %v864
    %v866 = vld [vmem:[%s8] sm:$0x1]
    %v868 = vlaneseq
    %v869 = vshrl.u32 %v868, 7
    %v870 = vsub.s32 0, %v869
    %v871 = vrot.slane %v866, %v870
    %v873 = vadd.f32 %v865, %v871
    %874 = vmax.xlane.f32.xlu0 %v873
    %v875 = vpop.xlane.xlu0 %874
    %v876 = vsub.f32 %v873, %v875
    %v877 = vmul.f32 %v876, 1.442695
    %v878 = vpow.pop %v877
    %879 = vadd.xlane.f32.xlu0 %v878
    %v880 = vpop.xlane.xlu0 %879
    %v881 = vlog2.pop %v880
    %v882 = vmul.f32 %v881, 0.6931472
    %v883 = vsub.f32 %v876, %v882
    %884 = vst [vmem:[#allocation4] sm:$0xff] %v883
    // Predicated region
    $region38: #{tpu_custom_call.1} parent=1 // pred_check
      _
    $region39: #{tpu_custom_call.1} parent=1 // pred_check_branch
      %886 = sbr.rel (0) target = $region41
    $region40: #{tpu_custom_call.1} parent=1 // pred_region
      %s888 = ssub.s32 128, 128
      %889 = vsyncadd [#allocation5], %s888
      %s891 = sshll.u32 [#allocation4], 4
      %s892 = int_to_ptr.vmem [resolvable:$true] %s891
      %894 = dma.vmem_to_hbm [thread:$0]  %s892, 128, %s9, [#allocation5]
    $region41: #{tpu_custom_call.1} parent=1 // pred_fallthru
      _
    // Predicated region
    $region42: #{tpu_custom_call.1} parent=1 // pred_check
      _
    $region43: #{tpu_custom_call.1} parent=1 // pred_check_branch
      %896 = sbr.rel (0) target = $region45
    $region44: #{tpu_custom_call.1} parent=1 // pred_region
      %897 = dma.done [#allocation5], 128
    $region45: #{tpu_custom_call.1} parent=1 // pred_fallthru
      _
    %898 = vsyncpa [#allocation5], 1

</llo_original>
